<compile_context>
chip_gen: v6e
topology: v6e:2x2x1
jax: 0.10.0
libtpu: 0.0.40
codegen_flags: <defaults>
</compile_context>

<pallas_src>
import functools

import jax
import jax.numpy as jnp
from jax import lax
from jax.experimental import pallas as pl
from jax.experimental.pallas import tpu as pltpu
import numpy as np


def _rnn_kernel(x_ref, wih_ref, whh_ref, b_ref, o_ref):
    """One grid step: full recurrence for a block of TB histories.

    x_ref   : [TB, N, SE]  histories (VMEM)
    wih_ref : [SE, SE]     input-to-hidden weight, pre-transposed (x @ W)
    whh_ref : [SE, SE]     hidden-to-hidden weight, pre-transposed (h @ W)
    b_ref   : [1, SE]      combined bias (b_ih + b_hh)
    o_ref   : [TB, SE]     output = final hidden states
    """
    tb, n, se = x_ref.shape

    # Loop-invariant loads, hoisted once; these stay register-resident.
    x = x_ref[...]            # [TB, N, SE]
    wih = wih_ref[...]        # [SE, SE]
    whh = whh_ref[...]        # [SE, SE]
    b = b_ref[...]            # [1, SE] — broadcasts over rows

    # Time-parallel input projection: one big MXU matmul + fused bias add.
    # (Only the hidden->hidden chain below is serial.)
    xw = jnp.dot(x.reshape(tb * n, se), wih,
                 preferred_element_type=jnp.float32) + b       # [TB*N, SE]
    xw = xw.reshape(tb, n, se)

    # Hidden state carried purely in vregs. N is static and tiny, so the
    # recurrence is fully unrolled: no loop/branch overhead, static slices,
    # exactly one MXU matmul per step on the critical path.
    h = jnp.zeros((tb, se), jnp.float32)
    for t in range(n):
        h = jnp.tanh(xw[:, t, :]
                     + jnp.dot(h, whh, preferred_element_type=jnp.float32))

    o_ref[...] = h.astype(o_ref.dtype)


@functools.partial(jax.jit, static_argnames=("block_b",))
def history_embedder_batched(histories, w_ih_t, w_hh_t, bias, *, block_b=None):
    """histories: [B, N, SE] -> [B, SE] (final RNN hidden state per history)."""
    b_dim, n, se = histories.shape
    if block_b is None:
        block_b = b_dim          # whole batch in one block (grid of 1)
    grid = (pl.cdiv(b_dim, block_b),)
    return pl.pallas_call(
        _rnn_kernel,
        out_shape=jax.ShapeDtypeStruct((b_dim, se), histories.dtype),
        grid=grid,
        in_specs=[
            pl.BlockSpec((block_b, n, se), lambda i: (i, 0, 0)),
            pl.BlockSpec((se, se), lambda i: (0, 0)),
            pl.BlockSpec((se, se), lambda i: (0, 0)),
            pl.BlockSpec((1, se), lambda i: (0, 0)),
        ],
        out_specs=pl.BlockSpec((block_b, se), lambda i: (i, 0)),
        compiler_params=pltpu.CompilerParams(
            dimension_semantics=("parallel",)),   # batch chunks -> both TCs on v7x
    )(histories, w_ih_t, w_hh_t, bias)


@jax.jit
def history_embedder(services_history, w_ih_t, w_hh_t, bias):
    """services_history: [N, SE] -> embedding [SE]  (module forward semantics)."""
    out = history_embedder_batched(services_history[None], w_ih_t, w_hh_t, bias)
    return out[0]


def _reference_batched(histories, w_ih_t, w_hh_t, bias):
    """Pure-JAX reference of the same RNN (sanity check)."""
    x = histories.astype(jnp.float32)                        # [B, N, SE]
    wih = w_ih_t.astype(jnp.float32)
    whh = w_hh_t.astype(jnp.float32)
    b = bias.astype(jnp.float32)

    def step(h, x_t):
        return jnp.tanh(x_t @ wih + b + h @ whh), None

    h0 = jnp.zeros((x.shape[0], x.shape[2]), jnp.float32)
    h_final, _ = lax.scan(step, h0, jnp.moveaxis(x, 1, 0))   # scan over time
    return h_final.astype(histories.dtype)


if __name__ == "__main__":
    N, SE, B = 8, 32, 2   # history length, service embedding dim, demo batch

    key = jax.random.PRNGKey(0)
    k_x, k_wih, k_whh, k_b = jax.random.split(key, 4)

    scale = 1.0 / np.sqrt(SE)   # PyTorch nn.RNN default init range
    histories = jax.random.normal(k_x, (B, N, SE), dtype=jnp.float32)
    w_ih_t = jax.random.uniform(k_wih, (SE, SE), jnp.float32, -scale, scale)
    w_hh_t = jax.random.uniform(k_whh, (SE, SE), jnp.float32, -scale, scale)
    bias = jax.random.uniform(k_b, (1, SE), jnp.float32, -scale, scale)  # b_ih+b_hh

    # Module forward semantics: single history [N, SE] -> [SE].
    out_single = history_embedder(histories[0], w_ih_t, w_hh_t, bias)
    out_single = jax.block_until_ready(out_single)
    assert out_single.shape == (SE,), out_single.shape

    # Batched path: [B, N, SE] -> [B, SE] in one pallas_call.
    out_batched = history_embedder_batched(histories, w_ih_t, w_hh_t, bias)
    out_batched = jax.block_until_ready(out_batched)
    assert out_batched.shape == (B, SE), out_batched.shape

    ref = _reference_batched(histories, w_ih_t, w_hh_t, bias)
    np.testing.assert_allclose(np.asarray(out_single), np.asarray(ref[0]),
                               rtol=1e-5, atol=1e-5)
    np.testing.assert_allclose(np.asarray(out_batched), np.asarray(ref),
                               rtol=1e-5, atol=1e-5)

    print("KERNEL_OK")
</pallas_src>

<mosaic_0001>
module attributes {stable_mosaic.version = 11 : i64} {
  func.func @_rnn_kernel(%arg0: i32, %arg1: memref<1x8x32xf32, #tpu.memory_space<vmem>>, %arg2: memref<32x32xf32, #tpu.memory_space<vmem>>, %arg3: memref<32x32xf32, #tpu.memory_space<vmem>>, %arg4: memref<1x32xf32, #tpu.memory_space<vmem>>, %arg5: memref<1x32xf32, #tpu.memory_space<vmem>>) attributes {dimension_semantics = [#tpu.dimension_semantics<parallel>], iteration_bounds = array<i64: 1>, scalar_prefetch = 0 : i64, scratch_operands = 0 : i64, tpu.core_type = #tpu.core_type<tc>, window_params = [{transform_indices = @transform_0, window_bounds = array<i64: 1, 8, 32>}, {pipeline_mode = #tpu.pipeline_mode<synchronous>, transform_indices = @transform_1, window_bounds = array<i64: 32, 32>}, {pipeline_mode = #tpu.pipeline_mode<synchronous>, transform_indices = @transform_2, window_bounds = array<i64: 32, 32>}, {pipeline_mode = #tpu.pipeline_mode<synchronous>, transform_indices = @transform_3, window_bounds = array<i64: 1, 32>}, {transform_indices = @transform_4, window_bounds = array<i64: 1, 32>}]} {
    %c0 = arith.constant 0 : index
    %c0_0 = arith.constant 0 : index
    %c0_1 = arith.constant 0 : index
    %0 = vector.load %arg1[%c0, %c0_0, %c0_1] : memref<1x8x32xf32, #tpu.memory_space<vmem>>, vector<1x8x32xf32>
    %c0_2 = arith.constant 0 : index
    %c0_3 = arith.constant 0 : index
    %1 = vector.load %arg2[%c0_2, %c0_3] : memref<32x32xf32, #tpu.memory_space<vmem>>, vector<32x32xf32>
    %c0_4 = arith.constant 0 : index
    %c0_5 = arith.constant 0 : index
    %2 = vector.load %arg3[%c0_4, %c0_5] : memref<32x32xf32, #tpu.memory_space<vmem>>, vector<32x32xf32>
    %c0_6 = arith.constant 0 : index
    %c0_7 = arith.constant 0 : index
    %3 = vector.load %arg4[%c0_6, %c0_7] : memref<1x32xf32, #tpu.memory_space<vmem>>, vector<1x32xf32>
    %4 = vector.shape_cast %0 : vector<1x8x32xf32> to vector<8x32xf32>
    %cst = arith.constant dense<0.000000e+00> : vector<8x32xf32>
    %5 = tpu.matmul %4, %1, %cst {dimension_numbers = #tpu.dot_dimension_numbers<[1], [0], [0], [1], [0, 0, 1, 1], [], []>} : vector<8x32xf32>, vector<32x32xf32>, vector<8x32xf32> -> vector<8x32xf32>
    %6 = vector.broadcast %3 : vector<1x32xf32> to vector<8x32xf32>
    %7 = arith.addf %5, %6 : vector<8x32xf32>
    %8 = vector.shape_cast %7 : vector<8x32xf32> to vector<1x8x32xf32>
    %cst_8 = arith.constant 0.000000e+00 : f32
    %9 = vector.broadcast %cst_8 : f32 to vector<1x32xf32>
    %10 = vector.extract_strided_slice %8 {offsets = [0, 0, 0], sizes = [1, 1, 32], strides = [1, 1, 1]} : vector<1x8x32xf32> to vector<1x1x32xf32>
    %11 = vector.shape_cast %10 : vector<1x1x32xf32> to vector<1x32xf32>
    %cst_9 = arith.constant dense<0.000000e+00> : vector<1x32xf32>
    %12 = tpu.matmul %9, %2, %cst_9 {dimension_numbers = #tpu.dot_dimension_numbers<[1], [0], [0], [1], [0, 0, 1, 1], [], []>} : vector<1x32xf32>, vector<32x32xf32>, vector<1x32xf32> -> vector<1x32xf32>
    %13 = arith.addf %11, %12 : vector<1x32xf32>
    %14 = math.tanh %13 : vector<1x32xf32>
    %15 = vector.extract_strided_slice %8 {offsets = [0, 1, 0], sizes = [1, 1, 32], strides = [1, 1, 1]} : vector<1x8x32xf32> to vector<1x1x32xf32>
    %16 = vector.shape_cast %15 : vector<1x1x32xf32> to vector<1x32xf32>
    %cst_10 = arith.constant dense<0.000000e+00> : vector<1x32xf32>
    %17 = tpu.matmul %14, %2, %cst_10 {dimension_numbers = #tpu.dot_dimension_numbers<[1], [0], [0], [1], [0, 0, 1, 1], [], []>} : vector<1x32xf32>, vector<32x32xf32>, vector<1x32xf32> -> vector<1x32xf32>
    %18 = arith.addf %16, %17 : vector<1x32xf32>
    %19 = math.tanh %18 : vector<1x32xf32>
    %20 = vector.extract_strided_slice %8 {offsets = [0, 2, 0], sizes = [1, 1, 32], strides = [1, 1, 1]} : vector<1x8x32xf32> to vector<1x1x32xf32>
    %21 = vector.shape_cast %20 : vector<1x1x32xf32> to vector<1x32xf32>
    %cst_11 = arith.constant dense<0.000000e+00> : vector<1x32xf32>
    %22 = tpu.matmul %19, %2, %cst_11 {dimension_numbers = #tpu.dot_dimension_numbers<[1], [0], [0], [1], [0, 0, 1, 1], [], []>} : vector<1x32xf32>, vector<32x32xf32>, vector<1x32xf32> -> vector<1x32xf32>
    %23 = arith.addf %21, %22 : vector<1x32xf32>
    %24 = math.tanh %23 : vector<1x32xf32>
    %25 = vector.extract_strided_slice %8 {offsets = [0, 3, 0], sizes = [1, 1, 32], strides = [1, 1, 1]} : vector<1x8x32xf32> to vector<1x1x32xf32>
    %26 = vector.shape_cast %25 : vector<1x1x32xf32> to vector<1x32xf32>
    %cst_12 = arith.constant dense<0.000000e+00> : vector<1x32xf32>
    %27 = tpu.matmul %24, %2, %cst_12 {dimension_numbers = #tpu.dot_dimension_numbers<[1], [0], [0], [1], [0, 0, 1, 1], [], []>} : vector<1x32xf32>, vector<32x32xf32>, vector<1x32xf32> -> vector<1x32xf32>
    %28 = arith.addf %26, %27 : vector<1x32xf32>
    %29 = math.tanh %28 : vector<1x32xf32>
    %30 = vector.extract_strided_slice %8 {offsets = [0, 4, 0], sizes = [1, 1, 32], strides = [1, 1, 1]} : vector<1x8x32xf32> to vector<1x1x32xf32>
    %31 = vector.shape_cast %30 : vector<1x1x32xf32> to vector<1x32xf32>
    %cst_13 = arith.constant dense<0.000000e+00> : vector<1x32xf32>
    %32 = tpu.matmul %29, %2, %cst_13 {dimension_numbers = #tpu.dot_dimension_numbers<[1], [0], [0], [1], [0, 0, 1, 1], [], []>} : vector<1x32xf32>, vector<32x32xf32>, vector<1x32xf32> -> vector<1x32xf32>
    %33 = arith.addf %31, %32 : vector<1x32xf32>
    %34 = math.tanh %33 : vector<1x32xf32>
    %35 = vector.extract_strided_slice %8 {offsets = [0, 5, 0], sizes = [1, 1, 32], strides = [1, 1, 1]} : vector<1x8x32xf32> to vector<1x1x32xf32>
    %36 = vector.shape_cast %35 : vector<1x1x32xf32> to vector<1x32xf32>
    %cst_14 = arith.constant dense<0.000000e+00> : vector<1x32xf32>
    %37 = tpu.matmul %34, %2, %cst_14 {dimension_numbers = #tpu.dot_dimension_numbers<[1], [0], [0], [1], [0, 0, 1, 1], [], []>} : vector<1x32xf32>, vector<32x32xf32>, vector<1x32xf32> -> vector<1x32xf32>
    %38 = arith.addf %36, %37 : vector<1x32xf32>
    %39 = math.tanh %38 : vector<1x32xf32>
    %40 = vector.extract_strided_slice %8 {offsets = [0, 6, 0], sizes = [1, 1, 32], strides = [1, 1, 1]} : vector<1x8x32xf32> to vector<1x1x32xf32>
    %41 = vector.shape_cast %40 : vector<1x1x32xf32> to vector<1x32xf32>
    %cst_15 = arith.constant dense<0.000000e+00> : vector<1x32xf32>
    %42 = tpu.matmul %39, %2, %cst_15 {dimension_numbers = #tpu.dot_dimension_numbers<[1], [0], [0], [1], [0, 0, 1, 1], [], []>} : vector<1x32xf32>, vector<32x32xf32>, vector<1x32xf32> -> vector<1x32xf32>
    %43 = arith.addf %41, %42 : vector<1x32xf32>
    %44 = math.tanh %43 : vector<1x32xf32>
    %45 = vector.extract_strided_slice %8 {offsets = [0, 7, 0], sizes = [1, 1, 32], strides = [1, 1, 1]} : vector<1x8x32xf32> to vector<1x1x32xf32>
    %46 = vector.shape_cast %45 : vector<1x1x32xf32> to vector<1x32xf32>
    %cst_16 = arith.constant dense<0.000000e+00> : vector<1x32xf32>
    %47 = tpu.matmul %44, %2, %cst_16 {dimension_numbers = #tpu.dot_dimension_numbers<[1], [0], [0], [1], [0, 0, 1, 1], [], []>} : vector<1x32xf32>, vector<32x32xf32>, vector<1x32xf32> -> vector<1x32xf32>
    %48 = arith.addf %46, %47 : vector<1x32xf32>
    %49 = math.tanh %48 : vector<1x32xf32>
    %c0_17 = arith.constant 0 : index
    %c0_18 = arith.constant 0 : index
    %50 = vector.load %arg5[%c0_17, %c0_18] : memref<1x32xf32, #tpu.memory_space<vmem>>, vector<1x32xf32>
    tpu.vector_store %arg5[%c0_17, %c0_18], %49 {strides = array<i32>} : memref<1x32xf32, #tpu.memory_space<vmem>>, vector<1x32xf32>,
    return
  }
  func.func @transform_0(%arg0: i32) -> (i32, i32, i32) {
    %c0_i32 = arith.constant 0 : i32
    %c0_i32_0 = arith.constant 0 : i32
    %c0_i32_1 = arith.constant 0 : i32
    return %arg0, %c0_i32, %c0_i32_0 : i32, i32, i32
  }
  func.func @transform_1(%arg0: i32) -> (i32, i32) {
    %c0_i32 = arith.constant 0 : i32
    %c0_i32_0 = arith.constant 0 : i32
    %c0_i32_1 = arith.constant 0 : i32
    return %c0_i32, %c0_i32_0 : i32, i32
  }
  func.func @transform_2(%arg0: i32) -> (i32, i32) {
    %c0_i32 = arith.constant 0 : i32
    %c0_i32_0 = arith.constant 0 : i32
    %c0_i32_1 = arith.constant 0 : i32
    return %c0_i32, %c0_i32_0 : i32, i32
  }
  func.func @transform_3(%arg0: i32) -> (i32, i32) {
    %c0_i32 = arith.constant 0 : i32
    %c0_i32_0 = arith.constant 0 : i32
    %c0_i32_1 = arith.constant 0 : i32
    return %c0_i32, %c0_i32_0 : i32, i32
  }
  func.func @transform_4(%arg0: i32) -> (i32, i32) {
    %c0_i32 = arith.constant 0 : i32
    %c0_i32_0 = arith.constant 0 : i32
    return %arg0, %c0_i32 : i32, i32
  }
}

</mosaic_0001>

<llo_original>
// kernel: history_embedder_batched.1
$region0: #{history_embedder_batched.1}
  #allocation0 [shape = 'u32[]', space=smem, size = 0x4, offset = 0x4, fixed_abs, tag = 'smem constant byte address 0x4 - core index']
  #allocation1 [shape = 'u32[144,128]{1,0:T(1,128)}', space=vmem, size = 0x12000, scoped, tag = 'internal scratch']
  %s0 = inlined_call_operand.hbm [shape: f32[1,8,32], index: 0, kind: input, shape index: {}]
  %s1 = inlined_call_operand.hbm [shape: f32[32,32], index: 1, kind: input, shape index: {}]
  %s2 = inlined_call_operand.hbm [shape: f32[32,32], index: 2, kind: input, shape index: {}]
  %s3 = inlined_call_operand.vmem [shape: f32[1,32], index: 3, kind: input, shape index: {}]
  %s4 = inlined_call_operand.hbm [shape: f32[1,32], index: 4, kind: output, shape index: {}]
  %s5 = sld [smem:[#allocation0]]
  $region38: #{history_embedder_batched.1} parent=0
    _
  %s7 = ssub.s32 1, %s5
  %s8 = scalar_select 0, %s7, %s5
  $region1: #{history_embedder_batched.1} parent=0
    #allocation2 [shape = 'u8[4096]{0}', space=vmem, size = 0x1000, scoped, tag = 'input window, operand 0, single buffered']
    #allocation3 [shape = 's32[1]{0}', space=sflag, size = 0x4, scoped, tag = 'scoped memory for history_embedder_batched.1']
    #allocation4 [shape = 's32[1]{0}', space=sflag, size = 0x4, scoped, tag = 'scoped memory for history_embedder_batched.1']
    #allocation5 [shape = 'u8[16384]{0}', space=vmem, size = 0x4000, scoped, tag = 'input window, operand 1, single buffered']
    #allocation6 [shape = 's32[1]{0}', space=sflag, size = 0x4, scoped, tag = 'scoped memory for history_embedder_batched.1']
    #allocation7 [shape = 'u8[16384]{0}', space=vmem, size = 0x4000, scoped, tag = 'input window, operand 2, single buffered']
    #allocation8 [shape = 'u8[512]{0}', space=vmem, size = 0x400, scoped, tag = 'output window, operand 0, single buffered']
    %9 = vsyncpa [#allocation3], 0
    %10 = vsyncpa [#allocation6], 0
    %11 = vsyncpa [#allocation4], 0
    // Predicated region
    $region2: #{history_embedder_batched.1} parent=1 // pred_check
      _
    $region3: #{history_embedder_batched.1} parent=1 // pred_check_branch
      %13 = sbr.rel (0) target = $region5
    $region4: #{history_embedder_batched.1} parent=1 // pred_region
      %s15 = ssub.s32 128, 128
      %16 = vsyncadd [#allocation3], %s15
      %s18 = sshll.u32 [#allocation2], 4
      %s19 = int_to_ptr.vmem [resolvable:$true] %s18
      %21 = dma.hbm_to_vmem [thread:$0]  %s0, 128, %s19, [#allocation3]
    $region5: #{history_embedder_batched.1} parent=1 // pred_fallthru
      _
    // Predicated region
    $region6: #{history_embedder_batched.1} parent=1 // pred_check
      _
    $region7: #{history_embedder_batched.1} parent=1 // pred_check_branch
      %23 = sbr.rel (0) target = $region9
    $region8: #{history_embedder_batched.1} parent=1 // pred_region
      %s25 = ssub.s32 512, 512
      %26 = vsyncadd [#allocation6], %s25
      %s27 = sshll.u32 [#allocation5], 4
      %s28 = int_to_ptr.vmem [resolvable:$true] %s27
      %33 = dma.hbm_to_vmem [thread:$0]  %s1, 512, %s28, [#allocation6], 128, 128, 8
    $region9: #{history_embedder_batched.1} parent=1 // pred_fallthru
      _
    // Predicated region
    $region10: #{history_embedder_batched.1} parent=1 // pred_check
      _
    $region11: #{history_embedder_batched.1} parent=1 // pred_check_branch
      %35 = sbr.rel (0) target = $region13
    $region12: #{history_embedder_batched.1} parent=1 // pred_region
      %s37 = ssub.s32 512, 512
      %38 = vsyncadd [#allocation6], %s37
      %s39 = sshll.u32 [#allocation7], 4
      %s40 = int_to_ptr.vmem [resolvable:$true] %s39
      %45 = dma.hbm_to_vmem [thread:$0]  %s2, 512, %s40, [#allocation6], 128, 128, 8
    $region13: #{history_embedder_batched.1} parent=1 // pred_fallthru
      _
    // Predicated region
    $region14: #{history_embedder_batched.1} parent=1 // pred_check
      _
    $region15: #{history_embedder_batched.1} parent=1 // pred_check_branch
      %47 = sbr.rel (0) target = $region17
    $region16: #{history_embedder_batched.1} parent=1 // pred_region
      _
    $region17: #{history_embedder_batched.1} parent=1 // pred_fallthru
      _
    // Predicated region
    $region18: #{history_embedder_batched.1} parent=1 // pred_check
      _
    $region19: #{history_embedder_batched.1} parent=1 // pred_check_branch
      %49 = sbr.rel (0) target = $region21
    $region20: #{history_embedder_batched.1} parent=1 // pred_region
      %50 = dma.done [#allocation3], 128
    $region21: #{history_embedder_batched.1} parent=1 // pred_fallthru
      _
    // Predicated region
    $region22: #{history_embedder_batched.1} parent=1 // pred_check
      _
    $region23: #{history_embedder_batched.1} parent=1 // pred_check_branch
      %52 = sbr.rel (0) target = $region25
    $region24: #{history_embedder_batched.1} parent=1 // pred_region
      %53 = dma.done [#allocation6], 512
    $region25: #{history_embedder_batched.1} parent=1 // pred_fallthru
      _
    // Predicated region
    $region26: #{history_embedder_batched.1} parent=1 // pred_check
      _
    $region27: #{history_embedder_batched.1} parent=1 // pred_check_branch
      %55 = sbr.rel (0) target = $region29
    $region28: #{history_embedder_batched.1} parent=1 // pred_region
      %56 = dma.done [#allocation6], 512
    $region29: #{history_embedder_batched.1} parent=1 // pred_fallthru
      _
    %v57 = vld [vmem:[#allocation2] sm:$0xff]
    %v58 = vld [vmem:[#allocation5] sm:$0xff]
    %v59 = vld [vmem:[#allocation5 + $0x8] sm:$0xff]
    %v60 = vld [vmem:[#allocation5 + $0x10] sm:$0xff]
    %v61 = vld [vmem:[#allocation5 + $0x18] sm:$0xff]
    %v62 = vld [vmem:[#allocation7] sm:$0xff]
    %v63 = vld [vmem:[#allocation7 + $0x8] sm:$0xff]
    %v64 = vld [vmem:[#allocation7 + $0x10] sm:$0xff]
    %v65 = vld [vmem:[#allocation7 + $0x18] sm:$0xff]
    %v66 = vld [vmem:[%s3] sm:$0x1]
    %v68 = vlaneseq
    %v69 = vshrl.u32 %v68, 7
    %v70 = vsub.s32 0, %v69
    %v71 = vrot.slane %v66, %v70
    %vm73 = vcmask 261120
    %v75 = vsel %vm73, %v57, 0
    %77 = vmatprep.subr.mxu0 0.0
    %78 = vmatpush1.msra.mxu0 0.0
    %79 = vmatprep.subr.mxu0 0.0
    %80 = vmatpush1.msra.mxu0 0.0
    %81 = vmatprep.subr.mxu0 0.0
    %82 = vmatpush1.msra.mxu0 0.0
    %83 = vmatprep.subr.mxu0 0.0
    %84 = vmatpush1.msra.mxu0 0.0
    %85 = vmatprep.subr.mxu0 0.0
    %86 = vmatpush1.msra.mxu0 0.0
    %87 = vmatprep.subr.mxu0 0.0
    %88 = vmatpush1.msra.mxu0 0.0
    %89 = vmatprep.subr.mxu0 0.0
    %90 = vmatpush1.msra.mxu0 0.0
    %91 = vmatprep.subr.mxu0 0.0
    %92 = vmatpush1.msra.mxu0 0.0
    %93 = vmatprep.subr.mxu0 0.0
    %94 = vmatpush1.msra.mxu0 0.0
    %95 = vmatprep.subr.mxu0 0.0
    %96 = vmatpush1.msra.mxu0 0.0
    %97 = vmatprep.subr.mxu0 0.0
    %98 = vmatpush1.msra.mxu0 0.0
    %99 = vmatprep.subr.mxu0 0.0
    %100 = vmatpush1.msra.mxu0 0.0
    %101 = vmatprep.subr.mxu0 0.0
    %102 = vmatpush1.msra.mxu0 %v61
    %103 = vmatprep.subr.mxu0 0.0
    %104 = vmatpush1.msra.mxu0 %v60
    %105 = vmatprep.subr.mxu0 0.0
    %106 = vmatpush1.msra.mxu0 %v59
    %107 = vmatprep.subr.mxu0 0.0
    %108 = vmatpush1.msra.mxu0 %v58
    %109 = vmatprep.subr.mxu0 0.0
    %110 = vmatpush2.msra.mxu0 0.0
    %111 = vmatprep.subr.mxu0 0.0
    %112 = vmatpush2.msra.mxu0 0.0
    %113 = vmatprep.subr.mxu0 0.0
    %114 = vmatpush2.msra.mxu0 0.0
    %115 = vmatprep.subr.mxu0 0.0
    %116 = vmatpush2.msra.mxu0 0.0
    %117 = vmatprep.subr.mxu0 0.0
    %118 = vmatpush2.msra.mxu0 0.0
    %119 = vmatprep.subr.mxu0 0.0
    %120 = vmatpush2.msra.mxu0 0.0
    %121 = vmatprep.subr.mxu0 0.0
    %122 = vmatpush2.msra.mxu0 0.0
    %123 = vmatprep.subr.mxu0 0.0
    %124 = vmatpush2.msra.mxu0 0.0
    %125 = vmatprep.subr.mxu0 0.0
    %126 = vmatpush2.msra.mxu0 0.0
    %127 = vmatprep.subr.mxu0 0.0
    %128 = vmatpush2.msra.mxu0 0.0
    %129 = vmatprep.subr.mxu0 0.0
    %130 = vmatpush2.msra.mxu0 0.0
    %131 = vmatprep.subr.mxu0 0.0
    %132 = vmatpush2.msra.mxu0 0.0
    %133 = vmatprep.subr.mxu0 0.0
    %134 = vmatpush2.msra.mxu0 0.0
    %135 = vmatprep.subr.mxu0 0.0
    %136 = vmatpush2.msra.mxu0 0.0
    %137 = vmatprep.subr.mxu0 0.0
    %138 = vmatpush2.msra.mxu0 0.0
    %139 = vmatprep.subr.mxu0 0.0
    %140 = vmatpush2.msra.mxu0 0.0
    %141 = vmatprep.mubr.f32.mxu0 0.0
    %142 = vmatmul.mubr.f32.gmra.mxu0 %v75
    %v143 = vpop.f32.mrf.mxu0
    %v144 = vadd.f32 %v71, %v143
    %v145 = vpop.f32.mrf.mxu0
    %146 = vdwg.mxu0
    %v148 = vsel %vm73, 0.0, 0
    %150 = vmatprep.subr.mxu0 0.0
    %151 = vmatpush1.msra.mxu0 0.0
    %152 = vmatprep.subr.mxu0 0.0
    %153 = vmatpush1.msra.mxu0 0.0
    %154 = vmatprep.subr.mxu0 0.0
    %155 = vmatpush1.msra.mxu0 0.0
    %156 = vmatprep.subr.mxu0 0.0
    %157 = vmatpush1.msra.mxu0 0.0
    %158 = vmatprep.subr.mxu0 0.0
    %159 = vmatpush1.msra.mxu0 0.0
    %160 = vmatprep.subr.mxu0 0.0
    %161 = vmatpush1.msra.mxu0 0.0
    %162 = vmatprep.subr.mxu0 0.0
    %163 = vmatpush1.msra.mxu0 0.0
    %164 = vmatprep.subr.mxu0 0.0
    %165 = vmatpush1.msra.mxu0 0.0
    %166 = vmatprep.subr.mxu0 0.0
    %167 = vmatpush1.msra.mxu0 0.0
    %168 = vmatprep.subr.mxu0 0.0
    %169 = vmatpush1.msra.mxu0 0.0
    %170 = vmatprep.subr.mxu0 0.0
    %171 = vmatpush1.msra.mxu0 0.0
    %172 = vmatprep.subr.mxu0 0.0
    %173 = vmatpush1.msra.mxu0 0.0
    %174 = vmatprep.subr.mxu0 0.0
    %175 = vmatpush1.msra.mxu0 %v65
    %176 = vmatprep.subr.mxu0 0.0
    %177 = vmatpush1.msra.mxu0 %v64
    %178 = vmatprep.subr.mxu0 0.0
    %179 = vmatpush1.msra.mxu0 %v63
    %180 = vmatprep.subr.mxu0 0.0
    %181 = vmatpush1.msra.mxu0 %v62
    %182 = vmatprep.subr.mxu0 0.0
    %183 = vmatpush2.msra.mxu0 0.0
    %184 = vmatprep.subr.mxu0 0.0
    %185 = vmatpush2.msra.mxu0 0.0
    %186 = vmatprep.subr.mxu0 0.0
    %187 = vmatpush2.msra.mxu0 0.0
    %188 = vmatprep.subr.mxu0 0.0
    %189 = vmatpush2.msra.mxu0 0.0
    %190 = vmatprep.subr.mxu0 0.0
    %191 = vmatpush2.msra.mxu0 0.0
    %192 = vmatprep.subr.mxu0 0.0
    %193 = vmatpush2.msra.mxu0 0.0
    %194 = vmatprep.subr.mxu0 0.0
    %195 = vmatpush2.msra.mxu0 0.0
    %196 = vmatprep.subr.mxu0 0.0
    %197 = vmatpush2.msra.mxu0 0.0
    %198 = vmatprep.subr.mxu0 0.0
    %199 = vmatpush2.msra.mxu0 0.0
    %200 = vmatprep.subr.mxu0 0.0
    %201 = vmatpush2.msra.mxu0 0.0
    %202 = vmatprep.subr.mxu0 0.0
    %203 = vmatpush2.msra.mxu0 0.0
    %204 = vmatprep.subr.mxu0 0.0
    %205 = vmatpush2.msra.mxu0 0.0
    %206 = vmatprep.subr.mxu0 0.0
    %207 = vmatpush2.msra.mxu0 0.0
    %208 = vmatprep.subr.mxu0 0.0
    %209 = vmatpush2.msra.mxu0 0.0
    %210 = vmatprep.subr.mxu0 0.0
    %211 = vmatpush2.msra.mxu0 0.0
    %212 = vmatprep.subr.mxu0 0.0
    %213 = vmatpush2.msra.mxu0 0.0
    %214 = vmatprep.mubr.f32.mxu0 0.0
    %215 = vmatmul.mubr.f32.gmra.mxu0 %v148
    %v216 = vpop.f32.mrf.mxu0
    %v217 = vadd.f32 0.0, %v216
    %v218 = vpop.f32.mrf.mxu0
    %219 = vdwg.mxu0
    %v220 = vadd.f32 %v144, %v217
    %v221 = vtanh.pop %v220
    %v223 = vsel %vm73, %v221, 0
    %225 = vmatprep.subr.mxu0 0.0
    %226 = vmatpush1.msra.mxu0 0.0
    %227 = vmatprep.subr.mxu0 0.0
    %228 = vmatpush1.msra.mxu0 0.0
    %229 = vmatprep.subr.mxu0 0.0
    %230 = vmatpush1.msra.mxu0 0.0
    %231 = vmatprep.subr.mxu0 0.0
    %232 = vmatpush1.msra.mxu0 0.0
    %233 = vmatprep.subr.mxu0 0.0
    %234 = vmatpush1.msra.mxu0 0.0
    %235 = vmatprep.subr.mxu0 0.0
    %236 = vmatpush1.msra.mxu0 0.0
    %237 = vmatprep.subr.mxu0 0.0
    %238 = vmatpush1.msra.mxu0 0.0
    %239 = vmatprep.subr.mxu0 0.0
    %240 = vmatpush1.msra.mxu0 0.0
    %241 = vmatprep.subr.mxu0 0.0
    %242 = vmatpush1.msra.mxu0 0.0
    %243 = vmatprep.subr.mxu0 0.0
    %244 = vmatpush1.msra.mxu0 0.0
    %245 = vmatprep.subr.mxu0 0.0
    %246 = vmatpush1.msra.mxu0 0.0
    %247 = vmatprep.subr.mxu0 0.0
    %248 = vmatpush1.msra.mxu0 0.0
    %249 = vmatprep.subr.mxu0 0.0
    %250 = vmatpush1.msra.mxu0 %v65
    %251 = vmatprep.subr.mxu0 0.0
    %252 = vmatpush1.msra.mxu0 %v64
    %253 = vmatprep.subr.mxu0 0.0
    %254 = vmatpush1.msra.mxu0 %v63
    %255 = vmatprep.subr.mxu0 0.0
    %256 = vmatpush1.msra.mxu0 %v62
    %257 = vmatprep.subr.mxu0 0.0
    %258 = vmatpush2.msra.mxu0 0.0
    %259 = vmatprep.subr.mxu0 0.0
    %260 = vmatpush2.msra.mxu0 0.0
    %261 = vmatprep.subr.mxu0 0.0
    %262 = vmatpush2.msra.mxu0 0.0
    %263 = vmatprep.subr.mxu0 0.0
    %264 = vmatpush2.msra.mxu0 0.0
    %265 = vmatprep.subr.mxu0 0.0
    %266 = vmatpush2.msra.mxu0 0.0
    %267 = vmatprep.subr.mxu0 0.0
    %268 = vmatpush2.msra.mxu0 0.0
    %269 = vmatprep.subr.mxu0 0.0
    %270 = vmatpush2.msra.mxu0 0.0
    %271 = vmatprep.subr.mxu0 0.0
    %272 = vmatpush2.msra.mxu0 0.0
    %273 = vmatprep.subr.mxu0 0.0
    %274 = vmatpush2.msra.mxu0 0.0
    %275 = vmatprep.subr.mxu0 0.0
    %276 = vmatpush2.msra.mxu0 0.0
    %277 = vmatprep.subr.mxu0 0.0
    %278 = vmatpush2.msra.mxu0 0.0
    %279 = vmatprep.subr.mxu0 0.0
    %280 = vmatpush2.msra.mxu0 0.0
    %281 = vmatprep.subr.mxu0 0.0
    %282 = vmatpush2.msra.mxu0 0.0
    %283 = vmatprep.subr.mxu0 0.0
    %284 = vmatpush2.msra.mxu0 0.0
    %285 = vmatprep.subr.mxu0 0.0
    %286 = vmatpush2.msra.mxu0 0.0
    %287 = vmatprep.subr.mxu0 0.0
    %288 = vmatpush2.msra.mxu0 0.0
    %289 = vmatprep.mubr.f32.mxu0 0.0
    %290 = vmatmul.mubr.f32.gmra.mxu0 %v223
    %v291 = vpop.f32.mrf.mxu0
    %v292 = vadd.f32 0.0, %v291
    %v293 = vpop.f32.mrf.mxu0
    %294 = vdwg.mxu0
    %v296 = vrot.slane %v292, 7
    %v298 = vadd.f32 %v144, %v296
    %v299 = vtanh.pop %v298
    %v301 = vrot.slane %v299, 1
    %v302 = vsel %vm73, %v301, 0
    %304 = vmatprep.subr.mxu0 0.0
    %305 = vmatpush1.msra.mxu0 0.0
    %306 = vmatprep.subr.mxu0 0.0
    %307 = vmatpush1.msra.mxu0 0.0
    %308 = vmatprep.subr.mxu0 0.0
    %309 = vmatpush1.msra.mxu0 0.0
    %310 = vmatprep.subr.mxu0 0.0
    %311 = vmatpush1.msra.mxu0 0.0
    %312 = vmatprep.subr.mxu0 0.0
    %313 = vmatpush1.msra.mxu0 0.0
    %314 = vmatprep.subr.mxu0 0.0
    %315 = vmatpush1.msra.mxu0 0.0
    %316 = vmatprep.subr.mxu0 0.0
    %317 = vmatpush1.msra.mxu0 0.0
    %318 = vmatprep.subr.mxu0 0.0
    %319 = vmatpush1.msra.mxu0 0.0
    %320 = vmatprep.subr.mxu0 0.0
    %321 = vmatpush1.msra.mxu0 0.0
    %322 = vmatprep.subr.mxu0 0.0
    %323 = vmatpush1.msra.mxu0 0.0
    %324 = vmatprep.subr.mxu0 0.0
    %325 = vmatpush1.msra.mxu0 0.0
    %326 = vmatprep.subr.mxu0 0.0
    %327 = vmatpush1.msra.mxu0 0.0
    %328 = vmatprep.subr.mxu0 0.0
    %329 = vmatpush1.msra.mxu0 %v65
    %330 = vmatprep.subr.mxu0 0.0
    %331 = vmatpush1.msra.mxu0 %v64
    %332 = vmatprep.subr.mxu0 0.0
    %333 = vmatpush1.msra.mxu0 %v63
    %334 = vmatprep.subr.mxu0 0.0
    %335 = vmatpush1.msra.mxu0 %v62
    %336 = vmatprep.subr.mxu0 0.0
    %337 = vmatpush2.msra.mxu0 0.0
    %338 = vmatprep.subr.mxu0 0.0
    %339 = vmatpush2.msra.mxu0 0.0
    %340 = vmatprep.subr.mxu0 0.0
    %341 = vmatpush2.msra.mxu0 0.0
    %342 = vmatprep.subr.mxu0 0.0
    %343 = vmatpush2.msra.mxu0 0.0
    %344 = vmatprep.subr.mxu0 0.0
    %345 = vmatpush2.msra.mxu0 0.0
    %346 = vmatprep.subr.mxu0 0.0
    %347 = vmatpush2.msra.mxu0 0.0
    %348 = vmatprep.subr.mxu0 0.0
    %349 = vmatpush2.msra.mxu0 0.0
    %350 = vmatprep.subr.mxu0 0.0
    %351 = vmatpush2.msra.mxu0 0.0
    %352 = vmatprep.subr.mxu0 0.0
    %353 = vmatpush2.msra.mxu0 0.0
    %354 = vmatprep.subr.mxu0 0.0
    %355 = vmatpush2.msra.mxu0 0.0
    %356 = vmatprep.subr.mxu0 0.0
    %357 = vmatpush2.msra.mxu0 0.0
    %358 = vmatprep.subr.mxu0 0.0
    %359 = vmatpush2.msra.mxu0 0.0
    %360 = vmatprep.subr.mxu0 0.0
    %361 = vmatpush2.msra.mxu0 0.0
    %362 = vmatprep.subr.mxu0 0.0
    %363 = vmatpush2.msra.mxu0 0.0
    %364 = vmatprep.subr.mxu0 0.0
    %365 = vmatpush2.msra.mxu0 0.0
    %366 = vmatprep.subr.mxu0 0.0
    %367 = vmatpush2.msra.mxu0 0.0
    %368 = vmatprep.mubr.f32.mxu0 0.0
    %369 = vmatmul.mubr.f32.gmra.mxu0 %v302
    %v370 = vpop.f32.mrf.mxu0
    %v371 = vadd.f32 0.0, %v370
    %v372 = vpop.f32.mrf.mxu0
    %373 = vdwg.mxu0
    %v375 = vrot.slane %v371, 6
    %v377 = vadd.f32 %v144, %v375
    %v378 = vtanh.pop %v377
    %v380 = vrot.slane %v378, 2
    %v381 = vsel %vm73, %v380, 0
    %383 = vmatprep.subr.mxu0 0.0
    %384 = vmatpush1.msra.mxu0 0.0
    %385 = vmatprep.subr.mxu0 0.0
    %386 = vmatpush1.msra.mxu0 0.0
    %387 = vmatprep.subr.mxu0 0.0
    %388 = vmatpush1.msra.mxu0 0.0
    %389 = vmatprep.subr.mxu0 0.0
    %390 = vmatpush1.msra.mxu0 0.0
    %391 = vmatprep.subr.mxu0 0.0
    %392 = vmatpush1.msra.mxu0 0.0
    %393 = vmatprep.subr.mxu0 0.0
    %394 = vmatpush1.msra.mxu0 0.0
    %395 = vmatprep.subr.mxu0 0.0
    %396 = vmatpush1.msra.mxu0 0.0
    %397 = vmatprep.subr.mxu0 0.0
    %398 = vmatpush1.msra.mxu0 0.0
    %399 = vmatprep.subr.mxu0 0.0
    %400 = vmatpush1.msra.mxu0 0.0
    %401 = vmatprep.subr.mxu0 0.0
    %402 = vmatpush1.msra.mxu0 0.0
    %403 = vmatprep.subr.mxu0 0.0
    %404 = vmatpush1.msra.mxu0 0.0
    %405 = vmatprep.subr.mxu0 0.0
    %406 = vmatpush1.msra.mxu0 0.0
    %407 = vmatprep.subr.mxu0 0.0
    %408 = vmatpush1.msra.mxu0 %v65
    %409 = vmatprep.subr.mxu0 0.0
    %410 = vmatpush1.msra.mxu0 %v64
    %411 = vmatprep.subr.mxu0 0.0
    %412 = vmatpush1.msra.mxu0 %v63
    %413 = vmatprep.subr.mxu0 0.0
    %414 = vmatpush1.msra.mxu0 %v62
    %415 = vmatprep.subr.mxu0 0.0
    %416 = vmatpush2.msra.mxu0 0.0
    %417 = vmatprep.subr.mxu0 0.0
    %418 = vmatpush2.msra.mxu0 0.0
    %419 = vmatprep.subr.mxu0 0.0
    %420 = vmatpush2.msra.mxu0 0.0
    %421 = vmatprep.subr.mxu0 0.0
    %422 = vmatpush2.msra.mxu0 0.0
    %423 = vmatprep.subr.mxu0 0.0
    %424 = vmatpush2.msra.mxu0 0.0
    %425 = vmatprep.subr.mxu0 0.0
    %426 = vmatpush2.msra.mxu0 0.0
    %427 = vmatprep.subr.mxu0 0.0
    %428 = vmatpush2.msra.mxu0 0.0
    %429 = vmatprep.subr.mxu0 0.0
    %430 = vmatpush2.msra.mxu0 0.0
    %431 = vmatprep.subr.mxu0 0.0
    %432 = vmatpush2.msra.mxu0 0.0
    %433 = vmatprep.subr.mxu0 0.0
    %434 = vmatpush2.msra.mxu0 0.0
    %435 = vmatprep.subr.mxu0 0.0
    %436 = vmatpush2.msra.mxu0 0.0
    %437 = vmatprep.subr.mxu0 0.0
    %438 = vmatpush2.msra.mxu0 0.0
    %439 = vmatprep.subr.mxu0 0.0
    %440 = vmatpush2.msra.mxu0 0.0
    %441 = vmatprep.subr.mxu0 0.0
    %442 = vmatpush2.msra.mxu0 0.0
    %443 = vmatprep.subr.mxu0 0.0
    %444 = vmatpush2.msra.mxu0 0.0
    %445 = vmatprep.subr.mxu0 0.0
    %446 = vmatpush2.msra.mxu0 0.0
    %447 = vmatprep.mubr.f32.mxu0 0.0
    %448 = vmatmul.mubr.f32.gmra.mxu0 %v381
    %v449 = vpop.f32.mrf.mxu0
    %v450 = vadd.f32 0.0, %v449
    %v451 = vpop.f32.mrf.mxu0
    %452 = vdwg.mxu0
    %v454 = vrot.slane %v450, 5
    %v456 = vadd.f32 %v144, %v454
    %v457 = vtanh.pop %v456
    %v459 = vrot.slane %v457, 3
    %v460 = vsel %vm73, %v459, 0
    %462 = vmatprep.subr.mxu0 0.0
    %463 = vmatpush1.msra.mxu0 0.0
    %464 = vmatprep.subr.mxu0 0.0
    %465 = vmatpush1.msra.mxu0 0.0
    %466 = vmatprep.subr.mxu0 0.0
    %467 = vmatpush1.msra.mxu0 0.0
    %468 = vmatprep.subr.mxu0 0.0
    %469 = vmatpush1.msra.mxu0 0.0
    %470 = vmatprep.subr.mxu0 0.0
    %471 = vmatpush1.msra.mxu0 0.0
    %472 = vmatprep.subr.mxu0 0.0
    %473 = vmatpush1.msra.mxu0 0.0
    %474 = vmatprep.subr.mxu0 0.0
    %475 = vmatpush1.msra.mxu0 0.0
    %476 = vmatprep.subr.mxu0 0.0
    %477 = vmatpush1.msra.mxu0 0.0
    %478 = vmatprep.subr.mxu0 0.0
    %479 = vmatpush1.msra.mxu0 0.0
    %480 = vmatprep.subr.mxu0 0.0
    %481 = vmatpush1.msra.mxu0 0.0
    %482 = vmatprep.subr.mxu0 0.0
    %483 = vmatpush1.msra.mxu0 0.0
    %484 = vmatprep.subr.mxu0 0.0
    %485 = vmatpush1.msra.mxu0 0.0
    %486 = vmatprep.subr.mxu0 0.0
    %487 = vmatpush1.msra.mxu0 %v65
    %488 = vmatprep.subr.mxu0 0.0
    %489 = vmatpush1.msra.mxu0 %v64
    %490 = vmatprep.subr.mxu0 0.0
    %491 = vmatpush1.msra.mxu0 %v63
    %492 = vmatprep.subr.mxu0 0.0
    %493 = vmatpush1.msra.mxu0 %v62
    %494 = vmatprep.subr.mxu0 0.0
    %495 = vmatpush2.msra.mxu0 0.0
    %496 = vmatprep.subr.mxu0 0.0
    %497 = vmatpush2.msra.mxu0 0.0
    %498 = vmatprep.subr.mxu0 0.0
    %499 = vmatpush2.msra.mxu0 0.0
    %500 = vmatprep.subr.mxu0 0.0
    %501 = vmatpush2.msra.mxu0 0.0
    %502 = vmatprep.subr.mxu0 0.0
    %503 = vmatpush2.msra.mxu0 0.0
    %504 = vmatprep.subr.mxu0 0.0
    %505 = vmatpush2.msra.mxu0 0.0
    %506 = vmatprep.subr.mxu0 0.0
    %507 = vmatpush2.msra.mxu0 0.0
    %508 = vmatprep.subr.mxu0 0.0
    %509 = vmatpush2.msra.mxu0 0.0
    %510 = vmatprep.subr.mxu0 0.0
    %511 = vmatpush2.msra.mxu0 0.0
    %512 = vmatprep.subr.mxu0 0.0
    %513 = vmatpush2.msra.mxu0 0.0
    %514 = vmatprep.subr.mxu0 0.0
    %515 = vmatpush2.msra.mxu0 0.0
    %516 = vmatprep.subr.mxu0 0.0
    %517 = vmatpush2.msra.mxu0 0.0
    %518 = vmatprep.subr.mxu0 0.0
    %519 = vmatpush2.msra.mxu0 0.0
    %520 = vmatprep.subr.mxu0 0.0
    %521 = vmatpush2.msra.mxu0 0.0
    %522 = vmatprep.subr.mxu0 0.0
    %523 = vmatpush2.msra.mxu0 0.0
    %524 = vmatprep.subr.mxu0 0.0
    %525 = vmatpush2.msra.mxu0 0.0
    %526 = vmatprep.mubr.f32.mxu0 0.0
    %527 = vmatmul.mubr.f32.gmra.mxu0 %v460
    %v528 = vpop.f32.mrf.mxu0
    %v529 = vadd.f32 0.0, %v528
    %v530 = vpop.f32.mrf.mxu0
    %531 = vdwg.mxu0
    %v533 = vrot.slane %v529, 4
    %v535 = vadd.f32 %v144, %v533
    %v536 = vtanh.pop %v535
    %v538 = vrot.slane %v536, 4
    %v539 = vsel %vm73, %v538, 0
    %541 = vmatprep.subr.mxu0 0.0
    %542 = vmatpush1.msra.mxu0 0.0
    %543 = vmatprep.subr.mxu0 0.0
    %544 = vmatpush1.msra.mxu0 0.0
    %545 = vmatprep.subr.mxu0 0.0
    %546 = vmatpush1.msra.mxu0 0.0
    %547 = vmatprep.subr.mxu0 0.0
    %548 = vmatpush1.msra.mxu0 0.0
    %549 = vmatprep.subr.mxu0 0.0
    %550 = vmatpush1.msra.mxu0 0.0
    %551 = vmatprep.subr.mxu0 0.0
    %552 = vmatpush1.msra.mxu0 0.0
    %553 = vmatprep.subr.mxu0 0.0
    %554 = vmatpush1.msra.mxu0 0.0
    %555 = vmatprep.subr.mxu0 0.0
    %556 = vmatpush1.msra.mxu0 0.0
    %557 = vmatprep.subr.mxu0 0.0
    %558 = vmatpush1.msra.mxu0 0.0
    %559 = vmatprep.subr.mxu0 0.0
    %560 = vmatpush1.msra.mxu0 0.0
    %561 = vmatprep.subr.mxu0 0.0
    %562 = vmatpush1.msra.mxu0 0.0
    %563 = vmatprep.subr.mxu0 0.0
    %564 = vmatpush1.msra.mxu0 0.0
    %565 = vmatprep.subr.mxu0 0.0
    %566 = vmatpush1.msra.mxu0 %v65
    %567 = vmatprep.subr.mxu0 0.0
    %568 = vmatpush1.msra.mxu0 %v64
    %569 = vmatprep.subr.mxu0 0.0
    %570 = vmatpush1.msra.mxu0 %v63
    %571 = vmatprep.subr.mxu0 0.0
    %572 = vmatpush1.msra.mxu0 %v62
    %573 = vmatprep.subr.mxu0 0.0
    %574 = vmatpush2.msra.mxu0 0.0
    %575 = vmatprep.subr.mxu0 0.0
    %576 = vmatpush2.msra.mxu0 0.0
    %577 = vmatprep.subr.mxu0 0.0
    %578 = vmatpush2.msra.mxu0 0.0
    %579 = vmatprep.subr.mxu0 0.0
    %580 = vmatpush2.msra.mxu0 0.0
    %581 = vmatprep.subr.mxu0 0.0
    %582 = vmatpush2.msra.mxu0 0.0
    %583 = vmatprep.subr.mxu0 0.0
    %584 = vmatpush2.msra.mxu0 0.0
    %585 = vmatprep.subr.mxu0 0.0
    %586 = vmatpush2.msra.mxu0 0.0
    %587 = vmatprep.subr.mxu0 0.0
    %588 = vmatpush2.msra.mxu0 0.0
    %589 = vmatprep.subr.mxu0 0.0
    %590 = vmatpush2.msra.mxu0 0.0
    %591 = vmatprep.subr.mxu0 0.0
    %592 = vmatpush2.msra.mxu0 0.0
    %593 = vmatprep.subr.mxu0 0.0
    %594 = vmatpush2.msra.mxu0 0.0
    %595 = vmatprep.subr.mxu0 0.0
    %596 = vmatpush2.msra.mxu0 0.0
    %597 = vmatprep.subr.mxu0 0.0
    %598 = vmatpush2.msra.mxu0 0.0
    %599 = vmatprep.subr.mxu0 0.0
    %600 = vmatpush2.msra.mxu0 0.0
    %601 = vmatprep.subr.mxu0 0.0
    %602 = vmatpush2.msra.mxu0 0.0
    %603 = vmatprep.subr.mxu0 0.0
    %604 = vmatpush2.msra.mxu0 0.0
    %605 = vmatprep.mubr.f32.mxu0 0.0
    %606 = vmatmul.mubr.f32.gmra.mxu0 %v539
    %v607 = vpop.f32.mrf.mxu0
    %v608 = vadd.f32 0.0, %v607
    %v609 = vpop.f32.mrf.mxu0
    %610 = vdwg.mxu0
    %v612 = vrot.slane %v608, 3
    %v614 = vadd.f32 %v144, %v612
    %v615 = vtanh.pop %v614
    %v617 = vrot.slane %v615, 5
    %v618 = vsel %vm73, %v617, 0
    %620 = vmatprep.subr.mxu0 0.0
    %621 = vmatpush1.msra.mxu0 0.0
    %622 = vmatprep.subr.mxu0 0.0
    %623 = vmatpush1.msra.mxu0 0.0
    %624 = vmatprep.subr.mxu0 0.0
    %625 = vmatpush1.msra.mxu0 0.0
    %626 = vmatprep.subr.mxu0 0.0
    %627 = vmatpush1.msra.mxu0 0.0
    %628 = vmatprep.subr.mxu0 0.0
    %629 = vmatpush1.msra.mxu0 0.0
    %630 = vmatprep.subr.mxu0 0.0
    %631 = vmatpush1.msra.mxu0 0.0
    %632 = vmatprep.subr.mxu0 0.0
    %633 = vmatpush1.msra.mxu0 0.0
    %634 = vmatprep.subr.mxu0 0.0
    %635 = vmatpush1.msra.mxu0 0.0
    %636 = vmatprep.subr.mxu0 0.0
    %637 = vmatpush1.msra.mxu0 0.0
    %638 = vmatprep.subr.mxu0 0.0
    %639 = vmatpush1.msra.mxu0 0.0
    %640 = vmatprep.subr.mxu0 0.0
    %641 = vmatpush1.msra.mxu0 0.0
    %642 = vmatprep.subr.mxu0 0.0
    %643 = vmatpush1.msra.mxu0 0.0
    %644 = vmatprep.subr.mxu0 0.0
    %645 = vmatpush1.msra.mxu0 %v65
    %646 = vmatprep.subr.mxu0 0.0
    %647 = vmatpush1.msra.mxu0 %v64
    %648 = vmatprep.subr.mxu0 0.0
    %649 = vmatpush1.msra.mxu0 %v63
    %650 = vmatprep.subr.mxu0 0.0
    %651 = vmatpush1.msra.mxu0 %v62
    %652 = vmatprep.subr.mxu0 0.0
    %653 = vmatpush2.msra.mxu0 0.0
    %654 = vmatprep.subr.mxu0 0.0
    %655 = vmatpush2.msra.mxu0 0.0
    %656 = vmatprep.subr.mxu0 0.0
    %657 = vmatpush2.msra.mxu0 0.0
    %658 = vmatprep.subr.mxu0 0.0
    %659 = vmatpush2.msra.mxu0 0.0
    %660 = vmatprep.subr.mxu0 0.0
    %661 = vmatpush2.msra.mxu0 0.0
    %662 = vmatprep.subr.mxu0 0.0
    %663 = vmatpush2.msra.mxu0 0.0
    %664 = vmatprep.subr.mxu0 0.0
    %665 = vmatpush2.msra.mxu0 0.0
    %666 = vmatprep.subr.mxu0 0.0
    %667 = vmatpush2.msra.mxu0 0.0
    %668 = vmatprep.subr.mxu0 0.0
    %669 = vmatpush2.msra.mxu0 0.0
    %670 = vmatprep.subr.mxu0 0.0
    %671 = vmatpush2.msra.mxu0 0.0
    %672 = vmatprep.subr.mxu0 0.0
    %673 = vmatpush2.msra.mxu0 0.0
    %674 = vmatprep.subr.mxu0 0.0
    %675 = vmatpush2.msra.mxu0 0.0
    %676 = vmatprep.subr.mxu0 0.0
    %677 = vmatpush2.msra.mxu0 0.0
    %678 = vmatprep.subr.mxu0 0.0
    %679 = vmatpush2.msra.mxu0 0.0
    %680 = vmatprep.subr.mxu0 0.0
    %681 = vmatpush2.msra.mxu0 0.0
    %682 = vmatprep.subr.mxu0 0.0
    %683 = vmatpush2.msra.mxu0 0.0
    %684 = vmatprep.mubr.f32.mxu0 0.0
    %685 = vmatmul.mubr.f32.gmra.mxu0 %v618
    %v686 = vpop.f32.mrf.mxu0
    %v687 = vadd.f32 0.0, %v686
    %v688 = vpop.f32.mrf.mxu0
    %689 = vdwg.mxu0
    %v691 = vrot.slane %v687, 2
    %v693 = vadd.f32 %v144, %v691
    %v694 = vtanh.pop %v693
    %v696 = vrot.slane %v694, 6
    %v697 = vsel %vm73, %v696, 0
    %699 = vmatprep.subr.mxu0 0.0
    %700 = vmatpush1.msra.mxu0 0.0
    %701 = vmatprep.subr.mxu0 0.0
    %702 = vmatpush1.msra.mxu0 0.0
    %703 = vmatprep.subr.mxu0 0.0
    %704 = vmatpush1.msra.mxu0 0.0
    %705 = vmatprep.subr.mxu0 0.0
    %706 = vmatpush1.msra.mxu0 0.0
    %707 = vmatprep.subr.mxu0 0.0
    %708 = vmatpush1.msra.mxu0 0.0
    %709 = vmatprep.subr.mxu0 0.0
    %710 = vmatpush1.msra.mxu0 0.0
    %711 = vmatprep.subr.mxu0 0.0
    %712 = vmatpush1.msra.mxu0 0.0
    %713 = vmatprep.subr.mxu0 0.0
    %714 = vmatpush1.msra.mxu0 0.0
    %715 = vmatprep.subr.mxu0 0.0
    %716 = vmatpush1.msra.mxu0 0.0
    %717 = vmatprep.subr.mxu0 0.0
    %718 = vmatpush1.msra.mxu0 0.0
    %719 = vmatprep.subr.mxu0 0.0
    %720 = vmatpush1.msra.mxu0 0.0
    %721 = vmatprep.subr.mxu0 0.0
    %722 = vmatpush1.msra.mxu0 0.0
    %723 = vmatprep.subr.mxu0 0.0
    %724 = vmatpush1.msra.mxu0 %v65
    %725 = vmatprep.subr.mxu0 0.0
    %726 = vmatpush1.msra.mxu0 %v64
    %727 = vmatprep.subr.mxu0 0.0
    %728 = vmatpush1.msra.mxu0 %v63
    %729 = vmatprep.subr.mxu0 0.0
    %730 = vmatpush1.msra.mxu0 %v62
    %731 = vmatprep.subr.mxu0 0.0
    %732 = vmatpush2.msra.mxu0 0.0
    %733 = vmatprep.subr.mxu0 0.0
    %734 = vmatpush2.msra.mxu0 0.0
    %735 = vmatprep.subr.mxu0 0.0
    %736 = vmatpush2.msra.mxu0 0.0
    %737 = vmatprep.subr.mxu0 0.0
    %738 = vmatpush2.msra.mxu0 0.0
    %739 = vmatprep.subr.mxu0 0.0
    %740 = vmatpush2.msra.mxu0 0.0
    %741 = vmatprep.subr.mxu0 0.0
    %742 = vmatpush2.msra.mxu0 0.0
    %743 = vmatprep.subr.mxu0 0.0
    %744 = vmatpush2.msra.mxu0 0.0
    %745 = vmatprep.subr.mxu0 0.0
    %746 = vmatpush2.msra.mxu0 0.0
    %747 = vmatprep.subr.mxu0 0.0
    %748 = vmatpush2.msra.mxu0 0.0
    %749 = vmatprep.subr.mxu0 0.0
    %750 = vmatpush2.msra.mxu0 0.0
    %751 = vmatprep.subr.mxu0 0.0
    %752 = vmatpush2.msra.mxu0 0.0
    %753 = vmatprep.subr.mxu0 0.0
    %754 = vmatpush2.msra.mxu0 0.0
    %755 = vmatprep.subr.mxu0 0.0
    %756 = vmatpush2.msra.mxu0 0.0
    %757 = vmatprep.subr.mxu0 0.0
    %758 = vmatpush2.msra.mxu0 0.0
    %759 = vmatprep.subr.mxu0 0.0
    %760 = vmatpush2.msra.mxu0 0.0
    %761 = vmatprep.subr.mxu0 0.0
    %762 = vmatpush2.msra.mxu0 0.0
    %763 = vmatprep.mubr.f32.mxu0 0.0
    %764 = vmatmul.mubr.f32.gmra.mxu0 %v697
    %v765 = vpop.f32.mrf.mxu0
    %v766 = vadd.f32 0.0, %v765
    %v767 = vpop.f32.mrf.mxu0
    %768 = vdwg.mxu0
    %v770 = vrot.slane %v766, 1
    %v772 = vadd.f32 %v144, %v770
    %v773 = vtanh.pop %v772
    %vm774 = vcmask 261127
    %775 = vst.msk [vmem:[#allocation8 - $0x7] sm:$0x80] %vm774, %v773
    // Predicated region
    $region30: #{history_embedder_batched.1} parent=1 // pred_check
      _
    $region31: #{history_embedder_batched.1} parent=1 // pred_check_branch
      %777 = sbr.rel (0) target = $region33
    $region32: #{history_embedder_batched.1} parent=1 // pred_region
      %s779 = ssub.s32 16, 16
      %780 = vsyncadd [#allocation4], %s779
      %s782 = sshll.u32 [#allocation8], 4
      %s783 = int_to_ptr.vmem [resolvable:$true] %s782
      %785 = dma.vmem_to_hbm [thread:$0]  %s783, 16, %s4, [#allocation4]
    $region33: #{history_embedder_batched.1} parent=1 // pred_fallthru
      _
    // Predicated region
    $region34: #{history_embedder_batched.1} parent=1 // pred_check
      _
    $region35: #{history_embedder_batched.1} parent=1 // pred_check_branch
      %787 = sbr.rel (0) target = $region37
    $region36: #{history_embedder_batched.1} parent=1 // pred_region
      %788 = dma.done [#allocation4], 16
    $region37: #{history_embedder_batched.1} parent=1 // pred_fallthru
      _
    %789 = vsyncpa [#allocation3], 1
    %790 = vsyncpa [#allocation6], 1
    %791 = vsyncpa [#allocation4], 1

</llo_original>
